<compile_context>
chip_gen: v7x
topology: tpu7x:2x2x1
jax: 0.10.0
libtpu: 0.0.40
codegen_flags: <defaults>
</compile_context>

<pallas_src>
import functools

import jax
import jax.numpy as jnp
from jax.experimental import pallas as pl
from jax.experimental.pallas import tpu as pltpu


def _round_up(a, m):
    return ((a + m - 1) // m) * m


# ---------------------------------------------------------------------------
# Kernel: 4 fused (dot -> bias -> relu) layers on one batch tile.
# Weights are bf16, biases f32, accumulation f32.
# ---------------------------------------------------------------------------
def _ff_kernel(x_ref,
               w1_ref, b1_ref,
               w2_ref, b2_ref,
               w3_ref, b3_ref,
               w4_ref, b4_ref,
               o_ref):
    # fc1 (+ folded bn1) + relu
    h = jnp.dot(x_ref[...], w1_ref[...], preferred_element_type=jnp.float32)
    h = jnp.maximum(h + b1_ref[...], 0.0)
    # fc2 (+ folded bn2) + relu
    h = jnp.dot(h.astype(jnp.bfloat16), w2_ref[...],
                preferred_element_type=jnp.float32)
    h = jnp.maximum(h + b2_ref[...], 0.0)
    # fc3 + dropout(eval: identity) + relu   (output zero-padded to 128 lanes)
    h = jnp.dot(h.astype(jnp.bfloat16), w3_ref[...],
                preferred_element_type=jnp.float32)
    h = jnp.maximum(h + b3_ref[...], 0.0)
    # fc4   (output zero-padded to 128 lanes)
    out = jnp.dot(h.astype(jnp.bfloat16), w4_ref[...],
                  preferred_element_type=jnp.float32)
    out = out + b4_ref[...]
    o_ref[...] = out.astype(o_ref.dtype)


# ---------------------------------------------------------------------------
# Wrapper
# ---------------------------------------------------------------------------
def ff_classifier_forward(x, prepped_params, nclasses, *, tb=512):
    """x: (B, input_dim) float32. Returns (B, nclasses) float32."""
    B, D = x.shape
    (w1, b1, w2, b2, w3, b3, w4, b4) = prepped_params
    H1, H2, H3p, Cp = w1.shape[1], w2.shape[1], w3.shape[1], w4.shape[1]
    assert D == w1.shape[0]

    # --- batch tile selection ---------------------------------------------
    b8 = _round_up(B, 8)
    tb_eff = min(tb, b8)
    # Keep >=2 grid steps when the batch allows it (lets the "parallel" axis
    # be sharded across both TensorCores on v7x).
    if B > 8 and b8 // tb_eff < 2:
        tb_eff = max(8, _round_up(pl.cdiv(b8, 2), 8))
    Bp = _round_up(B, tb_eff)

    # Pad batch rows (padded rows produce garbage, sliced off below) and cast
    # the activation stream to bf16 for the MXU.
    if Bp != B:
        x = jnp.pad(x, ((0, Bp - B), (0, 0)))
    xb = x.astype(jnp.bfloat16)

    def full(shape):
        # Full-array block, revisited (same block index) at every grid step.
        return pl.BlockSpec(shape, lambda i: (0, 0))

    grid_spec = pltpu.PrefetchScalarGridSpec(
        num_scalar_prefetch=0,
        grid=(Bp // tb_eff,),
        in_specs=[
            pl.BlockSpec((tb_eff, D), lambda i: (i, 0)),   # x tile
            full((D, H1)), full((1, H1)),
            full((H1, H2)), full((1, H2)),
            full((H2, H3p)), full((1, H3p)),
            full((H3p, Cp)), full((1, Cp)),
        ],
        out_specs=pl.BlockSpec((tb_eff, Cp), lambda i: (i, 0)),
    )

    out = pl.pallas_call(
        _ff_kernel,
        out_shape=jax.ShapeDtypeStruct((Bp, Cp), jnp.float32),
        grid_spec=grid_spec,
        compiler_params=pltpu.CompilerParams(
            dimension_semantics=("parallel",)),
    )(xb, w1, b1, w2, b2, w3, b3, w4, b4)

    return out[:B, :nclasses]


# ---------------------------------------------------------------------------
# Parameter prep: fold BN into fc1/fc2, lane-pad fc3/fc4, cast weights to bf16.
# ---------------------------------------------------------------------------
def prepare_params(raw_params, *, lane=128):
    (w1, b1, s1, t1, w2, b2, s2, t2, w3, b3, w4, b4) = raw_params
    nclasses = w4.shape[1]

    # Fold BatchNorm (eval) into the preceding linear layer.
    w1f = (w1 * s1).astype(jnp.bfloat16)
    b1f = (b1 * s1 + t1).astype(jnp.float32)
    w2f = (w2 * s2).astype(jnp.bfloat16)
    b2f = (b2 * s2 + t2).astype(jnp.float32)

    # Zero-pad fc3 output and fc4 input/output up to a full 128-lane width.
    H3, C = w3.shape[1], w4.shape[1]
    H3p, Cp = _round_up(H3, lane), _round_up(C, lane)
    w3p = jnp.pad(w3, ((0, 0), (0, H3p - H3))).astype(jnp.bfloat16)
    b3p = jnp.pad(b3, ((0, 0), (0, H3p - H3))).astype(jnp.float32)
    w4p = jnp.pad(w4, ((0, H3p - H3), (0, Cp - C))).astype(jnp.bfloat16)
    b4p = jnp.pad(b4, ((0, 0), (0, Cp - C))).astype(jnp.float32)

    return (w1f, b1f, w2f, b2f, w3p, b3p, w4p, b4p), nclasses


# ---------------------------------------------------------------------------
# Synthetic parameters matching FFClassifier.__init__ shapes (eval-mode BN).
# ---------------------------------------------------------------------------
def make_params(key, input_dim=512, nclasses=40, eps=1e-5):
    ks = jax.random.split(key, 16)
    dims = [(input_dim, 256), (256, 128), (128, 64), (64, nclasses)]

    def linear(kw, kb, din, dout):
        bound = 1.0 / jnp.sqrt(din)
        w = jax.random.uniform(kw, (din, dout), jnp.float32, -bound, bound)
        b = jax.random.uniform(kb, (1, dout), jnp.float32, -bound, bound)
        return w, b

    w1, b1 = linear(ks[0], ks[1], *dims[0])
    w2, b2 = linear(ks[2], ks[3], *dims[1])
    w3, b3 = linear(ks[4], ks[5], *dims[2])
    w4, b4 = linear(ks[6], ks[7], *dims[3])

    def bn(kg, kb, km, kv, dim):
        gamma = 1.0 + 0.1 * jax.random.normal(kg, (1, dim), jnp.float32)
        beta = 0.1 * jax.random.normal(kb, (1, dim), jnp.float32)
        mean = 0.1 * jax.random.normal(km, (1, dim), jnp.float32)
        var = jnp.abs(1.0 + 0.1 * jax.random.normal(kv, (1, dim), jnp.float32))
        scale = gamma / jnp.sqrt(var + eps)
        shift = beta - mean * scale
        return scale, shift

    s1, t1 = bn(ks[8], ks[9], ks[10], ks[11], 256)
    s2, t2 = bn(ks[12], ks[13], ks[14], ks[15], 128)

    return (w1, b1, s1, t1, w2, b2, s2, t2, w3, b3, w4, b4)


def _ref_forward(x, raw_params):
    """Pure-JAX f32 reference of the original forward (eval mode)."""
    (w1, b1, s1, t1, w2, b2, s2, t2, w3, b3, w4, b4) = raw_params
    h = jnp.maximum((x @ w1 + b1) * s1 + t1, 0.0)
    h = jnp.maximum((h @ w2 + b2) * s2 + t2, 0.0)
    h = jnp.maximum(h @ w3 + b3, 0.0)
    return h @ w4 + b4


if __name__ == "__main__":
    key = jax.random.PRNGKey(0)
    kx, kp = jax.random.split(key)

    B, input_dim, nclasses = 64, 512, 40
    x = jax.random.normal(kx, (B, input_dim), jnp.float32)
    raw_params = make_params(kp, input_dim=input_dim, nclasses=nclasses)
    prepped, C = prepare_params(raw_params)

    out = ff_classifier_forward(x, prepped, C)
    out = jax.block_until_ready(out)

    ref = _ref_forward(x, raw_params)
    assert out.shape == (B, nclasses)
    # bf16 matmul operands + f32 accumulation -> loose but meaningful tolerance
    assert jnp.allclose(out, ref, atol=5e-2, rtol=5e-2), "mismatch vs JAX reference"

    print("KERNEL_OK")
</pallas_src>

<mosaic_0001>
module attributes {stable_mosaic.version = 11 : i64} {
  func.func @_ff_kernel(%arg0: i32, %arg1: memref<32x512xbf16, #tpu.memory_space<vmem>>, %arg2: memref<512x256xbf16, #tpu.memory_space<vmem>>, %arg3: memref<1x256xf32, #tpu.memory_space<vmem>>, %arg4: memref<256x128xbf16, #tpu.memory_space<vmem>>, %arg5: memref<1x128xf32, #tpu.memory_space<vmem>>, %arg6: memref<128x128xbf16, #tpu.memory_space<vmem>>, %arg7: memref<1x128xf32, #tpu.memory_space<vmem>>, %arg8: memref<128x128xbf16, #tpu.memory_space<vmem>>, %arg9: memref<1x128xf32, #tpu.memory_space<vmem>>, %arg10: memref<32x128xf32, #tpu.memory_space<vmem>>) attributes {dimension_semantics = [#tpu.dimension_semantics<parallel>], iteration_bounds = array<i64: 2>, scalar_prefetch = 0 : i64, scratch_operands = 0 : i64, tpu.core_type = #tpu.core_type<tc>, window_params = [{transform_indices = @transform_0, window_bounds = array<i64: 32, 512>}, {pipeline_mode = #tpu.pipeline_mode<synchronous>, transform_indices = @transform_1, window_bounds = array<i64: 512, 256>}, {pipeline_mode = #tpu.pipeline_mode<synchronous>, transform_indices = @transform_2, window_bounds = array<i64: 1, 256>}, {pipeline_mode = #tpu.pipeline_mode<synchronous>, transform_indices = @transform_3, window_bounds = array<i64: 256, 128>}, {pipeline_mode = #tpu.pipeline_mode<synchronous>, transform_indices = @transform_4, window_bounds = array<i64: 1, 128>}, {pipeline_mode = #tpu.pipeline_mode<synchronous>, transform_indices = @transform_5, window_bounds = array<i64: 128, 128>}, {pipeline_mode = #tpu.pipeline_mode<synchronous>, transform_indices = @transform_6, window_bounds = array<i64: 1, 128>}, {pipeline_mode = #tpu.pipeline_mode<synchronous>, transform_indices = @transform_7, window_bounds = array<i64: 128, 128>}, {pipeline_mode = #tpu.pipeline_mode<synchronous>, transform_indices = @transform_8, window_bounds = array<i64: 1, 128>}, {transform_indices = @transform_9, window_bounds = array<i64: 32, 128>}]} {
    %c0 = arith.constant 0 : index
    %c0_0 = arith.constant 0 : index
    %0 = vector.load %arg1[%c0, %c0_0] : memref<32x512xbf16, #tpu.memory_space<vmem>>, vector<32x512xbf16>
    %c0_1 = arith.constant 0 : index
    %c0_2 = arith.constant 0 : index
    %1 = vector.load %arg2[%c0_1, %c0_2] : memref<512x256xbf16, #tpu.memory_space<vmem>>, vector<512x256xbf16>
    %cst = arith.constant dense<0.000000e+00> : vector<32x256xf32>
    %2 = tpu.matmul %0, %1, %cst {dimension_numbers = #tpu.dot_dimension_numbers<[1], [0], [0], [1], [0, 0, 1, 1], [], []>} : vector<32x512xbf16>, vector<512x256xbf16>, vector<32x256xf32> -> vector<32x256xf32>
    %c0_3 = arith.constant 0 : index
    %c0_4 = arith.constant 0 : index
    %3 = vector.load %arg3[%c0_3, %c0_4] : memref<1x256xf32, #tpu.memory_space<vmem>>, vector<1x256xf32>
    %4 = vector.broadcast %3 : vector<1x256xf32> to vector<32x256xf32>
    %5 = arith.addf %2, %4 : vector<32x256xf32>
    %cst_5 = arith.constant 0.000000e+00 : f32
    %6 = vector.broadcast %cst_5 : f32 to vector<32x256xf32>
    %7 = arith.maximumf %5, %6 : vector<32x256xf32>
    %8 = arith.truncf %7 : vector<32x256xf32> to vector<32x256xbf16>
    %c0_6 = arith.constant 0 : index
    %c0_7 = arith.constant 0 : index
    %9 = vector.load %arg4[%c0_6, %c0_7] : memref<256x128xbf16, #tpu.memory_space<vmem>>, vector<256x128xbf16>
    %cst_8 = arith.constant dense<0.000000e+00> : vector<32x128xf32>
    %10 = tpu.matmul %8, %9, %cst_8 {dimension_numbers = #tpu.dot_dimension_numbers<[1], [0], [0], [1], [0, 0, 1, 1], [], []>} : vector<32x256xbf16>, vector<256x128xbf16>, vector<32x128xf32> -> vector<32x128xf32>
    %c0_9 = arith.constant 0 : index
    %c0_10 = arith.constant 0 : index
    %11 = vector.load %arg5[%c0_9, %c0_10] : memref<1x128xf32, #tpu.memory_space<vmem>>, vector<1x128xf32>
    %12 = vector.broadcast %11 : vector<1x128xf32> to vector<32x128xf32>
    %13 = arith.addf %10, %12 : vector<32x128xf32>
    %cst_11 = arith.constant 0.000000e+00 : f32
    %14 = vector.broadcast %cst_11 : f32 to vector<32x128xf32>
    %15 = arith.maximumf %13, %14 : vector<32x128xf32>
    %16 = arith.truncf %15 : vector<32x128xf32> to vector<32x128xbf16>
    %c0_12 = arith.constant 0 : index
    %c0_13 = arith.constant 0 : index
    %17 = vector.load %arg6[%c0_12, %c0_13] : memref<128x128xbf16, #tpu.memory_space<vmem>>, vector<128x128xbf16>
    %cst_14 = arith.constant dense<0.000000e+00> : vector<32x128xf32>
    %18 = tpu.matmul %16, %17, %cst_14 {dimension_numbers = #tpu.dot_dimension_numbers<[1], [0], [0], [1], [0, 0, 1, 1], [], []>} : vector<32x128xbf16>, vector<128x128xbf16>, vector<32x128xf32> -> vector<32x128xf32>
    %c0_15 = arith.constant 0 : index
    %c0_16 = arith.constant 0 : index
    %19 = vector.load %arg7[%c0_15, %c0_16] : memref<1x128xf32, #tpu.memory_space<vmem>>, vector<1x128xf32>
    %20 = vector.broadcast %19 : vector<1x128xf32> to vector<32x128xf32>
    %21 = arith.addf %18, %20 : vector<32x128xf32>
    %cst_17 = arith.constant 0.000000e+00 : f32
    %22 = vector.broadcast %cst_17 : f32 to vector<32x128xf32>
    %23 = arith.maximumf %21, %22 : vector<32x128xf32>
    %24 = arith.truncf %23 : vector<32x128xf32> to vector<32x128xbf16>
    %c0_18 = arith.constant 0 : index
    %c0_19 = arith.constant 0 : index
    %25 = vector.load %arg8[%c0_18, %c0_19] : memref<128x128xbf16, #tpu.memory_space<vmem>>, vector<128x128xbf16>
    %cst_20 = arith.constant dense<0.000000e+00> : vector<32x128xf32>
    %26 = tpu.matmul %24, %25, %cst_20 {dimension_numbers = #tpu.dot_dimension_numbers<[1], [0], [0], [1], [0, 0, 1, 1], [], []>} : vector<32x128xbf16>, vector<128x128xbf16>, vector<32x128xf32> -> vector<32x128xf32>
    %c0_21 = arith.constant 0 : index
    %c0_22 = arith.constant 0 : index
    %27 = vector.load %arg9[%c0_21, %c0_22] : memref<1x128xf32, #tpu.memory_space<vmem>>, vector<1x128xf32>
    %28 = vector.broadcast %27 : vector<1x128xf32> to vector<32x128xf32>
    %29 = arith.addf %26, %28 : vector<32x128xf32>
    %c0_23 = arith.constant 0 : index
    %c0_24 = arith.constant 0 : index
    %30 = vector.load %arg10[%c0_23, %c0_24] : memref<32x128xf32, #tpu.memory_space<vmem>>, vector<32x128xf32>
    tpu.vector_store %arg10[%c0_23, %c0_24], %29 {strides = array<i32>} : memref<32x128xf32, #tpu.memory_space<vmem>>, vector<32x128xf32>,
    return
  }
  func.func @transform_0(%arg0: i32) -> (i32, i32) {
    %c0_i32 = arith.constant 0 : i32
    %c0_i32_0 = arith.constant 0 : i32
    return %arg0, %c0_i32 : i32, i32
  }
  func.func @transform_1(%arg0: i32) -> (i32, i32) {
    %c0_i32 = arith.constant 0 : i32
    %c0_i32_0 = arith.constant 0 : i32
    %c0_i32_1 = arith.constant 0 : i32
    return %c0_i32, %c0_i32_0 : i32, i32
  }
  func.func @transform_2(%arg0: i32) -> (i32, i32) {
    %c0_i32 = arith.constant 0 : i32
    %c0_i32_0 = arith.constant 0 : i32
    %c0_i32_1 = arith.constant 0 : i32
    return %c0_i32, %c0_i32_0 : i32, i32
  }
  func.func @transform_3(%arg0: i32) -> (i32, i32) {
    %c0_i32 = arith.constant 0 : i32
    %c0_i32_0 = arith.constant 0 : i32
    %c0_i32_1 = arith.constant 0 : i32
    return %c0_i32, %c0_i32_0 : i32, i32
  }
  func.func @transform_4(%arg0: i32) -> (i32, i32) {
    %c0_i32 = arith.constant 0 : i32
    %c0_i32_0 = arith.constant 0 : i32
    %c0_i32_1 = arith.constant 0 : i32
    return %c0_i32, %c0_i32_0 : i32, i32
  }
  func.func @transform_5(%arg0: i32) -> (i32, i32) {
    %c0_i32 = arith.constant 0 : i32
    %c0_i32_0 = arith.constant 0 : i32
    %c0_i32_1 = arith.constant 0 : i32
    return %c0_i32, %c0_i32_0 : i32, i32
  }
  func.func @transform_6(%arg0: i32) -> (i32, i32) {
    %c0_i32 = arith.constant 0 : i32
    %c0_i32_0 = arith.constant 0 : i32
    %c0_i32_1 = arith.constant 0 : i32
    return %c0_i32, %c0_i32_0 : i32, i32
  }
  func.func @transform_7(%arg0: i32) -> (i32, i32) {
    %c0_i32 = arith.constant 0 : i32
    %c0_i32_0 = arith.constant 0 : i32
    %c0_i32_1 = arith.constant 0 : i32
    return %c0_i32, %c0_i32_0 : i32, i32
  }
  func.func @transform_8(%arg0: i32) -> (i32, i32) {
    %c0_i32 = arith.constant 0 : i32
    %c0_i32_0 = arith.constant 0 : i32
    %c0_i32_1 = arith.constant 0 : i32
    return %c0_i32, %c0_i32_0 : i32, i32
  }
  func.func @transform_9(%arg0: i32) -> (i32, i32) {
    %c0_i32 = arith.constant 0 : i32
    %c0_i32_0 = arith.constant 0 : i32
    return %arg0, %c0_i32 : i32, i32
  }
}

</mosaic_0001>

<llo_original>
// kernel: tpu_custom_call.1
$region0: #{tpu_custom_call.1}
  #allocation0 [shape = 'u32[]', space=smem, size = 0x4, offset = 0x4, fixed_abs, tag = 'smem constant byte address 0x4 - core index']
  #allocation1 [shape = 'u32[144,128]{1,0:T(1,128)}', space=vmem, size = 0x12000, scoped, tag = 'internal scratch']
  %s0 = inlined_call_operand.hbm [shape: bf16[64,512], index: 0, kind: input, shape index: {}]
  %s1 = inlined_call_operand.hbm [shape: bf16[512,256], index: 1, kind: input, shape index: {}]
  %s2 = inlined_call_operand.vmem [shape: f32[1,256], index: 2, kind: input, shape index: {}]
  %s3 = inlined_call_operand.hbm [shape: bf16[256,128], index: 3, kind: input, shape index: {}]
  %s4 = inlined_call_operand.vmem [shape: f32[1,128], index: 4, kind: input, shape index: {}]
  %s5 = inlined_call_operand.hbm [shape: bf16[128,128], index: 5, kind: input, shape index: {}]
  %s6 = inlined_call_operand.vmem [shape: f32[1,128], index: 6, kind: input, shape index: {}]
  %s7 = inlined_call_operand.hbm [shape: bf16[128,128], index: 7, kind: input, shape index: {}]
  %s8 = inlined_call_operand.vmem [shape: f32[1,128], index: 8, kind: input, shape index: {}]
  %s9 = inlined_call_operand.hbm [shape: f32[64,128], index: 9, kind: output, shape index: {}]
  %s10 = sld [smem:[#allocation0]]
  $region89: #{tpu_custom_call.1} parent=0
    _
  %s12 = ssub.s32 1, %s10
  %s13 = scalar_select 0, %s12, %s10
  $region1: #{tpu_custom_call.1} parent=0
    #allocation2 [shape = 'u8[65536]{0}', space=vmem, size = 0x10000, scoped, tag = 'input window, operand 0']
    #allocation3 [shape = 's32[2]{0}', space=sflag, size = 0x8, scoped, tag = 'scoped memory for tpu_custom_call.1']
    #allocation4 [shape = 's32[2]{0}', space=sflag, size = 0x8, scoped, tag = 'scoped memory for tpu_custom_call.1']
    #allocation5 [shape = 'u8[262144]{0}', space=vmem, size = 0x40000, scoped, tag = 'input window, operand 1, single buffered']
    #allocation6 [shape = 's32[1]{0}', space=sflag, size = 0x4, scoped, tag = 'scoped memory for tpu_custom_call.1']
    #allocation7 [shape = 'u8[65536]{0}', space=vmem, size = 0x10000, scoped, tag = 'input window, operand 3, single buffered']
    #allocation8 [shape = 'u8[32768]{0}', space=vmem, size = 0x8000, scoped, tag = 'input window, operand 5, single buffered']
    #allocation9 [shape = 's32[1]{0}', space=sflag, size = 0x4, scoped, tag = 'scoped memory for tpu_custom_call.1']
    #allocation10 [shape = 'u8[32768]{0}', space=vmem, size = 0x8000, scoped, tag = 'input window, operand 7, single buffered']
    #allocation11 [shape = 'u8[32768]{0}', space=vmem, size = 0x8000, scoped, tag = 'output window, operand 0']
    %14 = vsyncpa [#allocation3], 0
    %s15 = scalar_lea.sflag [#allocation3], 1
    %16 = vsyncpa %s15, 0
    %17 = vsyncpa [#allocation6], 0
    %18 = vsyncpa [#allocation9], 0
    %19 = vsyncpa [#allocation4], 0
    %s20 = scalar_lea.sflag [#allocation4], 1
    %21 = vsyncpa %s20, 0
    loop: start=0, step=1, limit=4
    $region2: #{tpu_custom_call.1} parent=1 // loop_pre_header
      _
    $region3: #{tpu_custom_call.1} parent=1 // loop_header
      %s23 = sphi 0, %s27
      %p24 = scmp.ge.s32.totalorder %s23, 4
      %s33 = sphi 0, %s35
      %s36 = sphi 0, %s33
      %s37 = sphi 0, %s36
      %s53 = sphi 0, %s37
      %s57 = sphi 0, %s57
      %s59 = sphi 0, %s57
      %s60 = sphi 0, %s59
      %s74 = sphi 0, %s60
      %s78 = sphi 0, %s78
      %s80 = sphi 0, %s78
      %s81 = sphi 0, %s80
      %s95 = sphi 0, %s81
      %s99 = sphi 0, %s99
      %s101 = sphi 0, %s99
      %s102 = sphi 0, %s101
      %s116 = sphi 0, %s102
      %s120 = sphi 0, %s120
      %s122 = sphi 0, %s120
      %s123 = sphi 0, %s122
      %s137 = sphi 0, %s123
      %s141 = sphi 0, %s141
      %s143 = sphi 0, %s141
      %s144 = sphi 0, %s143
      %s158 = sphi 0, %s144
      %s162 = sphi 0, %s162
      %s164 = sphi 0, %s162
      %s165 = sphi 0, %s164
      %s179 = sphi 0, %s165
      %s183 = sphi 0, %s183
      %s185 = sphi 0, %s183
      %s186 = sphi 0, %s185
      %s200 = sphi 0, %s186
      %s204 = sphi 0, %s204
      %s206 = sphi 0, %s204
      %s207 = sphi 0, %s206
      %s221 = sphi 0, %s207
      %s227 = sphi 0, %s229
      %s230 = sphi 0, %s227
      %s231 = sphi 0, %s230
      %s247 = sphi 0, %s231
    $region4: #{tpu_custom_call.1} parent=1 // loop_header_branch
      %26 = sbr.rel (%p24) target = $region8
    $region5: #{tpu_custom_call.1} parent=1 // loop_body
      %s28 = ssub.s32 %s23, 1
      %s29 = ssub.s32 %s23, 2
      %s30 = sadd.s32 %s23, 1
      %s31 = ssub.s32 %s23, %s30
      %p32 = scmp.eq.s32.totalorder %s31, 0
      %s34 = sadd.s32 %s33, 1
      %s35 = scalar_select %p32, %s33, %s34
      %p38 = pneg %p32
      %p39 = scmp.eq.s32.totalorder %s23, 1
      %p40 = por %p38, %p39
      %p41 = scmp.ne.s32.totalorder %s33, %s36
      %p42 = scmp.eq.s32.totalorder %s23, 0
      %p43 = por %p41, %p42
      %p44 = scmp.ne.s32.totalorder %s33, %s36
      %p45 = scmp.eq.s32.totalorder %s28, 1
      %p46 = por %p44, %p45
      %p47 = scmp.ne.s32.totalorder %s36, %s37
      %p48 = scmp.eq.s32.totalorder %s28, 0
      %p49 = por %p47, %p48
      %p50 = scmp.ne.s32.totalorder %s36, %s37
      %p51 = scmp.eq.s32.totalorder %s29, 1
      %p52 = por %p50, %p51
      %p54 = scmp.ne.s32.totalorder %s37, %s53
      %p55 = scmp.eq.s32.totalorder %s29, 0
      %p56 = por %p54, %p55
      %s58 = sadd.s32 %s57, 1
      %p61 = scmp.eq.s32.totalorder %s23, 1
      %p62 = scmp.ne.s32.totalorder %s57, %s59
      %p63 = scmp.eq.s32.totalorder %s23, 0
      %p64 = por %p62, %p63
      %p65 = scmp.ne.s32.totalorder %s57, %s59
      %p66 = scmp.eq.s32.totalorder %s28, 1
      %p67 = por %p65, %p66
      %p68 = scmp.ne.s32.totalorder %s59, %s60
      %p69 = scmp.eq.s32.totalorder %s28, 0
      %p70 = por %p68, %p69
      %p71 = scmp.ne.s32.totalorder %s59, %s60
      %p72 = scmp.eq.s32.totalorder %s29, 1
      %p73 = por %p71, %p72
      %p75 = scmp.ne.s32.totalorder %s60, %s74
      %p76 = scmp.eq.s32.totalorder %s29, 0
      %p77 = por %p75, %p76
      %s79 = sadd.s32 %s78, 1
      %p82 = scmp.eq.s32.totalorder %s23, 1
      %p83 = scmp.ne.s32.totalorder %s78, %s80
      %p84 = scmp.eq.s32.totalorder %s23, 0
      %p85 = por %p83, %p84
      %p86 = scmp.ne.s32.totalorder %s78, %s80
      %p87 = scmp.eq.s32.totalorder %s28, 1
      %p88 = por %p86, %p87
      %p89 = scmp.ne.s32.totalorder %s80, %s81
      %p90 = scmp.eq.s32.totalorder %s28, 0
      %p91 = por %p89, %p90
      %p92 = scmp.ne.s32.totalorder %s80, %s81
      %p93 = scmp.eq.s32.totalorder %s29, 1
      %p94 = por %p92, %p93
      %p96 = scmp.ne.s32.totalorder %s81, %s95
      %p97 = scmp.eq.s32.totalorder %s29, 0
      %p98 = por %p96, %p97
      %s100 = sadd.s32 %s99, 1
      %p103 = scmp.eq.s32.totalorder %s23, 1
      %p104 = scmp.ne.s32.totalorder %s99, %s101
      %p105 = scmp.eq.s32.totalorder %s23, 0
      %p106 = por %p104, %p105
      %p107 = scmp.ne.s32.totalorder %s99, %s101
      %p108 = scmp.eq.s32.totalorder %s28, 1
      %p109 = por %p107, %p108
      %p110 = scmp.ne.s32.totalorder %s101, %s102
      %p111 = scmp.eq.s32.totalorder %s28, 0
      %p112 = por %p110, %p111
      %p113 = scmp.ne.s32.totalorder %s101, %s102
      %p114 = scmp.eq.s32.totalorder %s29, 1
      %p115 = por %p113, %p114
      %p117 = scmp.ne.s32.totalorder %s102, %s116
      %p118 = scmp.eq.s32.totalorder %s29, 0
      %p119 = por %p117, %p118
      %s121 = sadd.s32 %s120, 1
      %p124 = scmp.eq.s32.totalorder %s23, 1
      %p125 = scmp.ne.s32.totalorder %s120, %s122
      %p126 = scmp.eq.s32.totalorder %s23, 0
      %p127 = por %p125, %p126
      %p128 = scmp.ne.s32.totalorder %s120, %s122
      %p129 = scmp.eq.s32.totalorder %s28, 1
      %p130 = por %p128, %p129
      %p131 = scmp.ne.s32.totalorder %s122, %s123
      %p132 = scmp.eq.s32.totalorder %s28, 0
      %p133 = por %p131, %p132
      %p134 = scmp.ne.s32.totalorder %s122, %s123
      %p135 = scmp.eq.s32.totalorder %s29, 1
      %p136 = por %p134, %p135
      %p138 = scmp.ne.s32.totalorder %s123, %s137
      %p139 = scmp.eq.s32.totalorder %s29, 0
      %p140 = por %p138, %p139
      %s142 = sadd.s32 %s141, 1
      %p145 = scmp.eq.s32.totalorder %s23, 1
      %p146 = scmp.ne.s32.totalorder %s141, %s143
      %p147 = scmp.eq.s32.totalorder %s23, 0
      %p148 = por %p146, %p147
      %p149 = scmp.ne.s32.totalorder %s141, %s143
      %p150 = scmp.eq.s32.totalorder %s28, 1
      %p151 = por %p149, %p150
      %p152 = scmp.ne.s32.totalorder %s143, %s144
      %p153 = scmp.eq.s32.totalorder %s28, 0
      %p154 = por %p152, %p153
      %p155 = scmp.ne.s32.totalorder %s143, %s144
      %p156 = scmp.eq.s32.totalorder %s29, 1
      %p157 = por %p155, %p156
      %p159 = scmp.ne.s32.totalorder %s144, %s158
      %p160 = scmp.eq.s32.totalorder %s29, 0
      %p161 = por %p159, %p160
      %s163 = sadd.s32 %s162, 1
      %p166 = scmp.eq.s32.totalorder %s23, 1
      %p167 = scmp.ne.s32.totalorder %s162, %s164
      %p168 = scmp.eq.s32.totalorder %s23, 0
      %p169 = por %p167, %p168
      %p170 = scmp.ne.s32.totalorder %s162, %s164
      %p171 = scmp.eq.s32.totalorder %s28, 1
      %p172 = por %p170, %p171
      %p173 = scmp.ne.s32.totalorder %s164, %s165
      %p174 = scmp.eq.s32.totalorder %s28, 0
      %p175 = por %p173, %p174
      %p176 = scmp.ne.s32.totalorder %s164, %s165
      %p177 = scmp.eq.s32.totalorder %s29, 1
      %p178 = por %p176, %p177
      %p180 = scmp.ne.s32.totalorder %s165, %s179
      %p181 = scmp.eq.s32.totalorder %s29, 0
      %p182 = por %p180, %p181
      %s184 = sadd.s32 %s183, 1
      %p187 = scmp.eq.s32.totalorder %s23, 1
      %p188 = scmp.ne.s32.totalorder %s183, %s185
      %p189 = scmp.eq.s32.totalorder %s23, 0
      %p190 = por %p188, %p189
      %p191 = scmp.ne.s32.totalorder %s183, %s185
      %p192 = scmp.eq.s32.totalorder %s28, 1
      %p193 = por %p191, %p192
      %p194 = scmp.ne.s32.totalorder %s185, %s186
      %p195 = scmp.eq.s32.totalorder %s28, 0
      %p196 = por %p194, %p195
      %p197 = scmp.ne.s32.totalorder %s185, %s186
      %p198 = scmp.eq.s32.totalorder %s29, 1
      %p199 = por %p197, %p198
      %p201 = scmp.ne.s32.totalorder %s186, %s200
      %p202 = scmp.eq.s32.totalorder %s29, 0
      %p203 = por %p201, %p202
      %s205 = sadd.s32 %s204, 1
      %p208 = scmp.eq.s32.totalorder %s23, 1
      %p209 = scmp.ne.s32.totalorder %s204, %s206
      %p210 = scmp.eq.s32.totalorder %s23, 0
      %p211 = por %p209, %p210
      %p212 = scmp.ne.s32.totalorder %s204, %s206
      %p213 = scmp.eq.s32.totalorder %s28, 1
      %p214 = por %p212, %p213
      %p215 = scmp.ne.s32.totalorder %s206, %s207
      %p216 = scmp.eq.s32.totalorder %s28, 0
      %p217 = por %p215, %p216
      %p218 = scmp.ne.s32.totalorder %s206, %s207
      %p219 = scmp.eq.s32.totalorder %s29, 1
      %p220 = por %p218, %p219
      %p222 = scmp.ne.s32.totalorder %s207, %s221
      %p223 = scmp.eq.s32.totalorder %s29, 0
      %p224 = por %p222, %p223
      %s225 = ssub.s32 %s23, %s30
      %p226 = scmp.eq.s32.totalorder %s225, 0
      %s228 = sadd.s32 %s227, 1
      %s229 = scalar_select %p226, %s227, %s228
      %p232 = pneg %p226
      %p233 = scmp.eq.s32.totalorder %s23, 1
      %p234 = por %p232, %p233
      %p235 = scmp.ne.s32.totalorder %s227, %s230
      %p236 = scmp.eq.s32.totalorder %s23, 0
      %p237 = por %p235, %p236
      %p238 = scmp.ne.s32.totalorder %s227, %s230
      %p239 = scmp.eq.s32.totalorder %s28, 1
      %p240 = por %p238, %p239
      %p241 = scmp.ne.s32.totalorder %s230, %s231
      %p242 = scmp.eq.s32.totalorder %s28, 0
      %p243 = por %p241, %p242
      %p244 = scmp.ne.s32.totalorder %s230, %s231
      %p245 = scmp.eq.s32.totalorder %s29, 1
      %p246 = por %p244, %p245
      %p248 = scmp.ne.s32.totalorder %s231, %s247
      %p249 = scmp.eq.s32.totalorder %s29, 0
      %p250 = por %p248, %p249
      %p251 = scmp.le.s32.totalorder 1, %s23
      %p252 = scmp.lt.s32.totalorder %s23, 3
      %p253 = pnand %p251, %p252
      %p254 = pneg %p253
      // Predicated region
      $region9: #{tpu_custom_call.1} parent=5 // pred_check
        _
      $region10: #{tpu_custom_call.1} parent=5 // pred_check_branch
        %256 = sbr.rel (%p253) target = $region12
      $region11: #{tpu_custom_call.1} parent=5 // pred_region
        %s257 = ssub.s32 %s23, 1
        // Predicated region
        $region13: #{tpu_custom_call.1} parent=11 // pred_check
          %p258 = pneg %p70
        $region14: #{tpu_custom_call.1} parent=11 // pred_check_branch
          %260 = sbr.rel (%p258) target = $region16
        $region15: #{tpu_custom_call.1} parent=11 // pred_region
          %s262 = ssub.s32 8192, 8192
          %263 = vsyncadd [#allocation6], %s262
          %s264 = sshll.u32 [#allocation5], 4
          %s265 = int_to_ptr.vmem [resolvable:$true] %s264
          %270 = dma.hbm_to_vmem [thread:$0]  %s1, 8192, %s265, [#allocation6], 128, 128, 8
        $region16: #{tpu_custom_call.1} parent=11 // pred_fallthru
          _
        // Predicated region
        $region17: #{tpu_custom_call.1} parent=11 // pred_check
          %p271 = pneg %p91
        $region18: #{tpu_custom_call.1} parent=11 // pred_check_branch
          %273 = sbr.rel (%p271) target = $region20
        $region19: #{tpu_custom_call.1} parent=11 // pred_region
          _
        $region20: #{tpu_custom_call.1} parent=11 // pred_fallthru
          _
        // Predicated region
        $region21: #{tpu_custom_call.1} parent=11 // pred_check
          %p274 = pneg %p112
        $region22: #{tpu_custom_call.1} parent=11 // pred_check_branch
          %276 = sbr.rel (%p274) target = $region24
        $region23: #{tpu_custom_call.1} parent=11 // pred_region
          %s278 = ssub.s32 2048, 2048
          %279 = vsyncadd [#allocation6], %s278
          %s280 = sshll.u32 [#allocation7], 4
          %s281 = int_to_ptr.vmem [resolvable:$true] %s280
          %286 = dma.hbm_to_vmem [thread:$0]  %s3, 2048, %s281, [#allocation6], 64, 64, 4
        $region24: #{tpu_custom_call.1} parent=11 // pred_fallthru
          _
        // Predicated region
        $region25: #{tpu_custom_call.1} parent=11 // pred_check
          %p287 = pneg %p133
        $region26: #{tpu_custom_call.1} parent=11 // pred_check_branch
          %289 = sbr.rel (%p287) target = $region28
        $region27: #{tpu_custom_call.1} parent=11 // pred_region
          _
        $region28: #{tpu_custom_call.1} parent=11 // pred_fallthru
          _
        // Predicated region
        $region29: #{tpu_custom_call.1} parent=11 // pred_check
          %p290 = pneg %p154
        $region30: #{tpu_custom_call.1} parent=11 // pred_check_branch
          %292 = sbr.rel (%p290) target = $region32
        $region31: #{tpu_custom_call.1} parent=11 // pred_region
          %s294 = ssub.s32 1024, 1024
          %295 = vsyncadd [#allocation9], %s294
          %s296 = sshll.u32 [#allocation8], 4
          %s297 = int_to_ptr.vmem [resolvable:$true] %s296
          %302 = dma.hbm_to_vmem [thread:$0]  %s5, 1024, %s297, [#allocation9], 64, 64, 4
        $region32: #{tpu_custom_call.1} parent=11 // pred_fallthru
          _
        // Predicated region
        $region33: #{tpu_custom_call.1} parent=11 // pred_check
          %p303 = pneg %p175
        $region34: #{tpu_custom_call.1} parent=11 // pred_check_branch
          %305 = sbr.rel (%p303) target = $region36
        $region35: #{tpu_custom_call.1} parent=11 // pred_region
          _
        $region36: #{tpu_custom_call.1} parent=11 // pred_fallthru
          _
        // Predicated region
        $region37: #{tpu_custom_call.1} parent=11 // pred_check
          %p306 = pneg %p196
        $region38: #{tpu_custom_call.1} parent=11 // pred_check_branch
          %308 = sbr.rel (%p306) target = $region40
        $region39: #{tpu_custom_call.1} parent=11 // pred_region
          %s310 = ssub.s32 1024, 1024
          %311 = vsyncadd [#allocation9], %s310
          %s312 = sshll.u32 [#allocation10], 4
          %s313 = int_to_ptr.vmem [resolvable:$true] %s312
          %318 = dma.hbm_to_vmem [thread:$0]  %s7, 1024, %s313, [#allocation9], 64, 64, 4
        $region40: #{tpu_custom_call.1} parent=11 // pred_fallthru
          _
        // Predicated region
        $region41: #{tpu_custom_call.1} parent=11 // pred_check
          %p319 = pneg %p217
        $region42: #{tpu_custom_call.1} parent=11 // pred_check_branch
          %321 = sbr.rel (%p319) target = $region44
        $region43: #{tpu_custom_call.1} parent=11 // pred_region
          _
        $region44: #{tpu_custom_call.1} parent=11 // pred_fallthru
          _
      $region12: #{tpu_custom_call.1} parent=5 // pred_fallthru
        _
      %p322 = scmp.lt.s32.totalorder %s23, 2
      // Predicated region
      $region45: #{tpu_custom_call.1} parent=5 // pred_check
        %p323 = pneg %p322
      $region46: #{tpu_custom_call.1} parent=5 // pred_check_branch
        %325 = sbr.rel (%p323) target = $region48
      $region47: #{tpu_custom_call.1} parent=5 // pred_region
        // Predicated region
        $region49: #{tpu_custom_call.1} parent=47 // pred_check
          %p326 = pneg %p43
        $region50: #{tpu_custom_call.1} parent=47 // pred_check_branch
          %328 = sbr.rel (%p326) target = $region52
        $region51: #{tpu_custom_call.1} parent=47 // pred_region
          %s329 = sand.u32 %s33, 1
          %s330 = scalar_lea.sflag [#allocation3], %s329
          %s331 = sand.u32 %s33, 1
          %s332 = smul.addr %s331, 64
          %s333 = scalar_lea.vmem [#allocation2], %s332
          %s334 = smul.u32 4, %s23
          %s336 = ssub.s32 1024, 1024
          %337 = vsyncadd %s330, %s336
          %s338 = smul.addr %s334, 4
          %s339 = smul.addr %s338, 64
          %s340 = scalar_lea.hbm %s0, %s339
          %s341 = sshll.u32 %s333, 4
          %s342 = int_to_ptr.vmem [resolvable:$true] %s341
          %347 = dma.hbm_to_vmem [thread:$0]  %s340, 1024, %s342, %s330, 256, 256, 16
        $region52: #{tpu_custom_call.1} parent=47 // pred_fallthru
          _
      $region48: #{tpu_custom_call.1} parent=5 // pred_fallthru
        _
      %p348 = scmp.le.s32.totalorder 1, %s23
      %p349 = scmp.lt.s32.totalorder %s23, 3
      %p350 = pnand %p348, %p349
      %p351 = pneg %p350
      // Predicated region
      $region53: #{tpu_custom_call.1} parent=5 // pred_check
        _
      $region54: #{tpu_custom_call.1} parent=5 // pred_check_branch
        %353 = sbr.rel (%p350) target = $region56
      $region55: #{tpu_custom_call.1} parent=5 // pred_region
        %s354 = ssub.s32 %s23, 1
        %s355 = sand.u32 %s36, 1
        %s356 = scalar_lea.sflag [#allocation3], %s355
        %s357 = sand.u32 %s36, 1
        %s358 = smul.addr %s357, 64
        %s359 = scalar_lea.vmem [#allocation2], %s358
        // Predicated region
        $region57: #{tpu_custom_call.1} parent=55 // pred_check
          %p360 = pneg %p49
        $region58: #{tpu_custom_call.1} parent=55 // pred_check_branch
          %362 = sbr.rel (%p360) target = $region60
        $region59: #{tpu_custom_call.1} parent=55 // pred_region
          %363 = dma.done %s356, 1024
        $region60: #{tpu_custom_call.1} parent=55 // pred_fallthru
          _
        // Predicated region
        $region61: #{tpu_custom_call.1} parent=55 // pred_check
          %p364 = pneg %p70
        $region62: #{tpu_custom_call.1} parent=55 // pred_check_branch
          %366 = sbr.rel (%p364) target = $region64
        $region63: #{tpu_custom_call.1} parent=55 // pred_region
          %367 = dma.done [#allocation6], 8192
        $region64: #{tpu_custom_call.1} parent=55 // pred_fallthru
          _
        // Predicated region
        $region65: #{tpu_custom_call.1} parent=55 // pred_check
          %p368 = pneg %p112
        $region66: #{tpu_custom_call.1} parent=55 // pred_check_branch
          %370 = sbr.rel (%p368) target = $region68
        $region67: #{tpu_custom_call.1} parent=55 // pred_region
          %371 = dma.done [#allocation6], 2048
        $region68: #{tpu_custom_call.1} parent=55 // pred_fallthru
          _
        // Predicated region
        $region69: #{tpu_custom_call.1} parent=55 // pred_check
          %p372 = pneg %p154
        $region70: #{tpu_custom_call.1} parent=55 // pred_check_branch
          %374 = sbr.rel (%p372) target = $region72
        $region71: #{tpu_custom_call.1} parent=55 // pred_region
          %375 = dma.done [#allocation9], 1024
        $region72: #{tpu_custom_call.1} parent=55 // pred_fallthru
          _
        // Predicated region
        $region73: #{tpu_custom_call.1} parent=55 // pred_check
          %p376 = pneg %p196
        $region74: #{tpu_custom_call.1} parent=55 // pred_check_branch
          %378 = sbr.rel (%p376) target = $region76
        $region75: #{tpu_custom_call.1} parent=55 // pred_region
          %379 = dma.done [#allocation9], 1024
        $region76: #{tpu_custom_call.1} parent=55 // pred_fallthru
          _
        %s380 = sand.u32 %s36, 1
        %s381 = scalar_lea.sflag [#allocation3], %s380
        %s382 = sand.u32 %s36, 1
        %s383 = smul.addr %s382, 64
        %s384 = scalar_lea.vmem [#allocation2], %s383
        %p385 = pneg %p49
        %p386 = pneg %p46
        %p387 = pneg %p70
        %p388 = pneg %p67
        %p389 = pneg %p91
        %p390 = pneg %p88
        %p391 = pneg %p112
        %p392 = pneg %p109
        %p393 = pneg %p133
        %p394 = pneg %p130
        %p395 = pneg %p154
        %p396 = pneg %p151
        %p397 = pneg %p175
        %p398 = pneg %p172
        %p399 = pneg %p196
        %p400 = pneg %p193
        %p401 = pneg %p217
        %p402 = pneg %p214
        %p403 = pneg %p243
        %p404 = pneg %p240
        %s405 = sand.u32 %s230, 1
        %s406 = scalar_lea.sflag [#allocation4], %s405
        %s407 = sand.u32 %s230, 1
        %s408 = smul.addr %s407, 32
        %s409 = scalar_lea.vmem [#allocation11], %s408
        %s410 = smul.u32 4, %s28
        %s411 = smul.u32 4, %s28
        %v413 = vld [vmem:[%s359] sm:$0xff]
        %v414 = vld [vmem:[%s359 + $0x8] sm:$0xff]
        %v415 = vld [vmem:[%s359 + $0x10] sm:$0xff]
        %v416 = vld [vmem:[%s359 + $0x18] sm:$0xff]
        %v417 = vld [vmem:[%s359 + $0x20] sm:$0xff]
        %v418 = vld [vmem:[%s359 + $0x28] sm:$0xff]
        %v419 = vld [vmem:[%s359 + $0x30] sm:$0xff]
        %v420 = vld [vmem:[%s359 + $0x38] sm:$0xff]
        %v421 = vld [vmem:[#allocation5] sm:$0xff]
        %v422 = vld [vmem:[#allocation5 + $0x8] sm:$0xff]
        %v423 = vld [vmem:[#allocation5 + $0x10] sm:$0xff]
        %v424 = vld [vmem:[#allocation5 + $0x18] sm:$0xff]
        %v425 = vld [vmem:[#allocation5 + $0x20] sm:$0xff]
        %v426 = vld [vmem:[#allocation5 + $0x28] sm:$0xff]
        %v427 = vld [vmem:[#allocation5 + $0x30] sm:$0xff]
        %v428 = vld [vmem:[#allocation5 + $0x38] sm:$0xff]
        %v429 = vld [vmem:[#allocation5 + $0x40] sm:$0xff]
        %v430 = vld [vmem:[#allocation5 + $0x48] sm:$0xff]
        %v431 = vld [vmem:[#allocation5 + $0x50] sm:$0xff]
        %v432 = vld [vmem:[#allocation5 + $0x58] sm:$0xff]
        %v433 = vld [vmem:[#allocation5 + $0x60] sm:$0xff]
        %v434 = vld [vmem:[#allocation5 + $0x68] sm:$0xff]
        %v435 = vld [vmem:[#allocation5 + $0x70] sm:$0xff]
        %v436 = vld [vmem:[#allocation5 + $0x78] sm:$0xff]
        %v437 = vld [vmem:[#allocation5 + $0x80] sm:$0xff]
        %v438 = vld [vmem:[#allocation5 + $0x88] sm:$0xff]
        %v439 = vld [vmem:[#allocation5 + $0x90] sm:$0xff]
        %v440 = vld [vmem:[#allocation5 + $0x98] sm:$0xff]
        %v441 = vld [vmem:[#allocation5 + $0xa0] sm:$0xff]
        %v442 = vld [vmem:[#allocation5 + $0xa8] sm:$0xff]
        %v443 = vld [vmem:[#allocation5 + $0xb0] sm:$0xff]
        %v444 = vld [vmem:[#allocation5 + $0xb8] sm:$0xff]
        %v445 = vld [vmem:[#allocation5 + $0xc0] sm:$0xff]
        %v446 = vld [vmem:[#allocation5 + $0xc8] sm:$0xff]
        %v447 = vld [vmem:[#allocation5 + $0xd0] sm:$0xff]
        %v448 = vld [vmem:[#allocation5 + $0xd8] sm:$0xff]
        %v449 = vld [vmem:[#allocation5 + $0xe0] sm:$0xff]
        %v450 = vld [vmem:[#allocation5 + $0xe8] sm:$0xff]
        %v451 = vld [vmem:[#allocation5 + $0xf0] sm:$0xff]
        %v452 = vld [vmem:[#allocation5 + $0xf8] sm:$0xff]
        %v453 = vld [vmem:[#allocation5 + $0x100] sm:$0xff]
        %v454 = vld [vmem:[#allocation5 + $0x108] sm:$0xff]
        %v455 = vld [vmem:[#allocation5 + $0x110] sm:$0xff]
        %v456 = vld [vmem:[#allocation5 + $0x118] sm:$0xff]
        %v457 = vld [vmem:[#allocation5 + $0x120] sm:$0xff]
        %v458 = vld [vmem:[#allocation5 + $0x128] sm:$0xff]
        %v459 = vld [vmem:[#allocation5 + $0x130] sm:$0xff]
        %v460 = vld [vmem:[#allocation5 + $0x138] sm:$0xff]
        %v461 = vld [vmem:[#allocation5 + $0x140] sm:$0xff]
        %v462 = vld [vmem:[#allocation5 + $0x148] sm:$0xff]
        %v463 = vld [vmem:[#allocation5 + $0x150] sm:$0xff]
        %v464 = vld [vmem:[#allocation5 + $0x158] sm:$0xff]
        %v465 = vld [vmem:[#allocation5 + $0x160] sm:$0xff]
        %v466 = vld [vmem:[#allocation5 + $0x168] sm:$0xff]
        %v467 = vld [vmem:[#allocation5 + $0x170] sm:$0xff]
        %v468 = vld [vmem:[#allocation5 + $0x178] sm:$0xff]
        %v469 = vld [vmem:[#allocation5 + $0x180] sm:$0xff]
        %v470 = vld [vmem:[#allocation5 + $0x188] sm:$0xff]
        %v471 = vld [vmem:[#allocation5 + $0x190] sm:$0xff]
        %v472 = vld [vmem:[#allocation5 + $0x198] sm:$0xff]
        %v473 = vld [vmem:[#allocation5 + $0x1a0] sm:$0xff]
        %v474 = vld [vmem:[#allocation5 + $0x1a8] sm:$0xff]
        %v475 = vld [vmem:[#allocation5 + $0x1b0] sm:$0xff]
        %v476 = vld [vmem:[#allocation5 + $0x1b8] sm:$0xff]
        %v477 = vld [vmem:[#allocation5 + $0x1c0] sm:$0xff]
        %v478 = vld [vmem:[#allocation5 + $0x1c8] sm:$0xff]
        %v479 = vld [vmem:[#allocation5 + $0x1d0] sm:$0xff]
        %v480 = vld [vmem:[#allocation5 + $0x1d8] sm:$0xff]
        %v481 = vld [vmem:[#allocation5 + $0x1e0] sm:$0xff]
        %v482 = vld [vmem:[#allocation5 + $0x1e8] sm:$0xff]
        %v483 = vld [vmem:[#allocation5 + $0x1f0] sm:$0xff]
        %v484 = vld [vmem:[#allocation5 + $0x1f8] sm:$0xff]
        %v485 = vld [vmem:[%s2] sm:$0x3]
        %v487 = vlaneseq
        %v488 = vshrl.u32 %v487, 7
        %v489 = vsub.s32 0, %v488
        %v490 = vrot.slane %v485, %v489
        %v491 = vlaneseq
        %v492 = vshrl.u32 %v491, 7
        %v493 = vsub.s32 1, %v492
        %v494 = vrot.slane %v485, %v493
        %v505 = vunpack.c.l.b16 %v413
        %v506 = vunpack.c.h.b16 %v413
        %v507 = vunpack.c.l.b16 %v414
        %v508 = vunpack.c.h.b16 %v414
        %v509 = vunpack.c.l.b16 %v415
        %v510 = vunpack.c.h.b16 %v415
        %v511 = vunpack.c.l.b16 %v416
        %v512 = vunpack.c.h.b16 %v416
        %v513 = vunpack.c.l.b16 %v417
        %v514 = vunpack.c.h.b16 %v417
        %v515 = vunpack.c.l.b16 %v418
        %v516 = vunpack.c.h.b16 %v418
        %v517 = vunpack.c.l.b16 %v419
        %v518 = vunpack.c.h.b16 %v419
        %v519 = vunpack.c.l.b16 %v420
        %v520 = vunpack.c.h.b16 %v420
        %v521 = vpack.c.b16 %v509, %v505
        %v522 = vpack.c.b16 %v510, %v506
        %v523 = vpack.c.b16 %v511, %v507
        %v524 = vpack.c.b16 %v512, %v508
        %v525 = vpack.c.b16 %v517, %v513
        %v526 = vpack.c.b16 %v518, %v514
        %v527 = vpack.c.b16 %v519, %v515
        %v528 = vpack.c.b16 %v520, %v516
        %v601 = vunpack.c.l.b16 %v421
        %v602 = vunpack.c.h.b16 %v421
        %v603 = vunpack.c.l.b16 %v422
        %v604 = vunpack.c.h.b16 %v422
        %v605 = vunpack.c.l.b16 %v423
        %v606 = vunpack.c.h.b16 %v423
        %v607 = vunpack.c.l.b16 %v424
        %v608 = vunpack.c.h.b16 %v424
        %v609 = vunpack.c.l.b16 %v425
        %v610 = vunpack.c.h.b16 %v425
        %v611 = vunpack.c.l.b16 %v426
        %v612 = vunpack.c.h.b16 %v426
        %v613 = vunpack.c.l.b16 %v427
        %v614 = vunpack.c.h.b16 %v427
        %v615 = vunpack.c.l.b16 %v428
        %v616 = vunpack.c.h.b16 %v428
        %v617 = vunpack.c.l.b16 %v429
        %v618 = vunpack.c.h.b16 %v429
        %v619 = vunpack.c.l.b16 %v430
        %v620 = vunpack.c.h.b16 %v430
        %v621 = vunpack.c.l.b16 %v431
        %v622 = vunpack.c.h.b16 %v431
        %v623 = vunpack.c.l.b16 %v432
        %v624 = vunpack.c.h.b16 %v432
        %v625 = vunpack.c.l.b16 %v433
        %v626 = vunpack.c.h.b16 %v433
        %v627 = vunpack.c.l.b16 %v434
        %v628 = vunpack.c.h.b16 %v434
        %v629 = vunpack.c.l.b16 %v435
        %v630 = vunpack.c.h.b16 %v435
        %v631 = vunpack.c.l.b16 %v436
        %v632 = vunpack.c.h.b16 %v436
        %v633 = vunpack.c.l.b16 %v437
        %v634 = vunpack.c.h.b16 %v437
        %v635 = vunpack.c.l.b16 %v438
        %v636 = vunpack.c.h.b16 %v438
        %v637 = vunpack.c.l.b16 %v439
        %v638 = vunpack.c.h.b16 %v439
        %v639 = vunpack.c.l.b16 %v440
        %v640 = vunpack.c.h.b16 %v440
        %v641 = vunpack.c.l.b16 %v441
        %v642 = vunpack.c.h.b16 %v441
        %v643 = vunpack.c.l.b16 %v442
        %v644 = vunpack.c.h.b16 %v442
        %v645 = vunpack.c.l.b16 %v443
        %v646 = vunpack.c.h.b16 %v443
        %v647 = vunpack.c.l.b16 %v444
        %v648 = vunpack.c.h.b16 %v444
        %v649 = vunpack.c.l.b16 %v445
        %v650 = vunpack.c.h.b16 %v445
        %v651 = vunpack.c.l.b16 %v446
        %v652 = vunpack.c.h.b16 %v446
        %v653 = vunpack.c.l.b16 %v447
        %v654 = vunpack.c.h.b16 %v447
        %v655 = vunpack.c.l.b16 %v448
        %v656 = vunpack.c.h.b16 %v448
        %v657 = vunpack.c.l.b16 %v449
        %v658 = vunpack.c.h.b16 %v449
        %v659 = vunpack.c.l.b16 %v450
        %v660 = vunpack.c.h.b16 %v450
        %v661 = vunpack.c.l.b16 %v451
        %v662 = vunpack.c.h.b16 %v451
        %v663 = vunpack.c.l.b16 %v452
        %v664 = vunpack.c.h.b16 %v452
        %v665 = vunpack.c.l.b16 %v453
        %v666 = vunpack.c.h.b16 %v453
        %v667 = vunpack.c.l.b16 %v454
        %v668 = vunpack.c.h.b16 %v454
        %v669 = vunpack.c.l.b16 %v455
        %v670 = vunpack.c.h.b16 %v455
        %v671 = vunpack.c.l.b16 %v456
        %v672 = vunpack.c.h.b16 %v456
        %v673 = vunpack.c.l.b16 %v457
        %v674 = vunpack.c.h.b16 %v457
        %v675 = vunpack.c.l.b16 %v458
        %v676 = vunpack.c.h.b16 %v458
        %v677 = vunpack.c.l.b16 %v459
        %v678 = vunpack.c.h.b16 %v459
        %v679 = vunpack.c.l.b16 %v460
        %v680 = vunpack.c.h.b16 %v460
        %v681 = vunpack.c.l.b16 %v461
        %v682 = vunpack.c.h.b16 %v461
        %v683 = vunpack.c.l.b16 %v462
        %v684 = vunpack.c.h.b16 %v462
        %v685 = vunpack.c.l.b16 %v463
        %v686 = vunpack.c.h.b16 %v463
        %v687 = vunpack.c.l.b16 %v464
        %v688 = vunpack.c.h.b16 %v464
        %v689 = vunpack.c.l.b16 %v465
        %v690 = vunpack.c.h.b16 %v465
        %v691 = vunpack.c.l.b16 %v466
        %v692 = vunpack.c.h.b16 %v466
        %v693 = vunpack.c.l.b16 %v467
        %v694 = vunpack.c.h.b16 %v467
        %v695 = vunpack.c.l.b16 %v468
        %v696 = vunpack.c.h.b16 %v468
        %v697 = vunpack.c.l.b16 %v469
        %v698 = vunpack.c.h.b16 %v469
        %v699 = vunpack.c.l.b16 %v470
        %v700 = vunpack.c.h.b16 %v470
        %v701 = vunpack.c.l.b16 %v471
        %v702 = vunpack.c.h.b16 %v471
        %v703 = vunpack.c.l.b16 %v472
        %v704 = vunpack.c.h.b16 %v472
        %v705 = vunpack.c.l.b16 %v473
        %v706 = vunpack.c.h.b16 %v473
        %v707 = vunpack.c.l.b16 %v474
        %v708 = vunpack.c.h.b16 %v474
        %v709 = vunpack.c.l.b16 %v475
        %v710 = vunpack.c.h.b16 %v475
        %v711 = vunpack.c.l.b16 %v476
        %v712 = vunpack.c.h.b16 %v476
        %v713 = vunpack.c.l.b16 %v477
        %v714 = vunpack.c.h.b16 %v477
        %v715 = vunpack.c.l.b16 %v478
        %v716 = vunpack.c.h.b16 %v478
        %v717 = vunpack.c.l.b16 %v479
        %v718 = vunpack.c.h.b16 %v479
        %v719 = vunpack.c.l.b16 %v480
        %v720 = vunpack.c.h.b16 %v480
        %v721 = vunpack.c.l.b16 %v481
        %v722 = vunpack.c.h.b16 %v481
        %v723 = vunpack.c.l.b16 %v482
        %v724 = vunpack.c.h.b16 %v482
        %v725 = vunpack.c.l.b16 %v483
        %v726 = vunpack.c.h.b16 %v483
        %v727 = vunpack.c.l.b16 %v484
        %v728 = vunpack.c.h.b16 %v484
        %v729 = vpack.c.b16 %v603, %v601
        %v730 = vpack.c.b16 %v604, %v602
        %v731 = vpack.c.b16 %v607, %v605
        %v732 = vpack.c.b16 %v608, %v606
        %v733 = vpack.c.b16 %v611, %v609
        %v734 = vpack.c.b16 %v612, %v610
        %v735 = vpack.c.b16 %v615, %v613
        %v736 = vpack.c.b16 %v616, %v614
        %v737 = vpack.c.b16 %v619, %v617
        %v738 = vpack.c.b16 %v620, %v618
        %v739 = vpack.c.b16 %v623, %v621
        %v740 = vpack.c.b16 %v624, %v622
        %v741 = vpack.c.b16 %v627, %v625
        %v742 = vpack.c.b16 %v628, %v626
        %v743 = vpack.c.b16 %v631, %v629
        %v744 = vpack.c.b16 %v632, %v630
        %v745 = vpack.c.b16 %v635, %v633
        %v746 = vpack.c.b16 %v636, %v634
        %v747 = vpack.c.b16 %v639, %v637
        %v748 = vpack.c.b16 %v640, %v638
        %v749 = vpack.c.b16 %v643, %v641
        %v750 = vpack.c.b16 %v644, %v642
        %v751 = vpack.c.b16 %v647, %v645
        %v752 = vpack.c.b16 %v648, %v646
        %v753 = vpack.c.b16 %v651, %v649
        %v754 = vpack.c.b16 %v652, %v650
        %v755 = vpack.c.b16 %v655, %v653
        %v756 = vpack.c.b16 %v656, %v654
        %v757 = vpack.c.b16 %v659, %v657
        %v758 = vpack.c.b16 %v660, %v658
        %v759 = vpack.c.b16 %v663, %v661
        %v760 = vpack.c.b16 %v664, %v662
        %v761 = vpack.c.b16 %v667, %v665
        %v762 = vpack.c.b16 %v668, %v666
        %v763 = vpack.c.b16 %v671, %v669
        %v764 = vpack.c.b16 %v672, %v670
        %v765 = vpack.c.b16 %v675, %v673
        %v766 = vpack.c.b16 %v676, %v674
        %v767 = vpack.c.b16 %v679, %v677
        %v768 = vpack.c.b16 %v680, %v678
        %v769 = vpack.c.b16 %v683, %v681
        %v770 = vpack.c.b16 %v684, %v682
        %v771 = vpack.c.b16 %v687, %v685
        %v772 = vpack.c.b16 %v688, %v686
        %v773 = vpack.c.b16 %v691, %v689
        %v774 = vpack.c.b16 %v692, %v690
        %v775 = vpack.c.b16 %v695, %v693
        %v776 = vpack.c.b16 %v696, %v694
        %v777 = vpack.c.b16 %v699, %v697
        %v778 = vpack.c.b16 %v700, %v698
        %v779 = vpack.c.b16 %v703, %v701
        %v780 = vpack.c.b16 %v704, %v702
        %v781 = vpack.c.b16 %v707, %v705
        %v782 = vpack.c.b16 %v708, %v706
        %v783 = vpack.c.b16 %v711, %v709
        %v784 = vpack.c.b16 %v712, %v710
        %v785 = vpack.c.b16 %v715, %v713
        %v786 = vpack.c.b16 %v716, %v714
        %v787 = vpack.c.b16 %v719, %v717
        %v788 = vpack.c.b16 %v720, %v718
        %v789 = vpack.c.b16 %v723, %v721
        %v790 = vpack.c.b16 %v724, %v722
        %v791 = vpack.c.b16 %v727, %v725
        %v792 = vpack.c.b16 %v728, %v726
        %857 = vmatprep.subr.bf16.mxu0 %v730
        %858 = vmatpush1.bf16.msra.mxu0 %v729
        %859 = vmatprep.subr.bf16.mxu0 %v732
        %860 = vmatpush1.bf16.msra.mxu0 %v731
        %861 = vmatprep.subr.bf16.mxu0 %v734
        %862 = vmatpush1.bf16.msra.mxu0 %v733
        %863 = vmatprep.subr.bf16.mxu0 %v736
        %864 = vmatpush1.bf16.msra.mxu0 %v735
        %865 = vmatprep.subr.bf16.mxu0 %v738
        %866 = vmatpush1.bf16.msra.mxu0 %v737
        %867 = vmatprep.subr.bf16.mxu0 %v740
        %868 = vmatpush1.bf16.msra.mxu0 %v739
        %869 = vmatprep.subr.bf16.mxu0 %v742
        %870 = vmatpush1.bf16.msra.mxu0 %v741
        %871 = vmatprep.subr.bf16.mxu0 %v744
        %872 = vmatpush1.bf16.msra.mxu0 %v743
        %873 = vmatprep.subr.bf16.mxu0 %v746
        %874 = vmatpush1.bf16.msra.mxu0 %v745
        %875 = vmatprep.subr.bf16.mxu0 %v748
        %876 = vmatpush1.bf16.msra.mxu0 %v747
        %877 = vmatprep.subr.bf16.mxu0 %v750
        %878 = vmatpush1.bf16.msra.mxu0 %v749
        %879 = vmatprep.subr.bf16.mxu0 %v752
        %880 = vmatpush1.bf16.msra.mxu0 %v751
        %881 = vmatprep.subr.bf16.mxu0 %v754
        %882 = vmatpush1.bf16.msra.mxu0 %v753
        %883 = vmatprep.subr.bf16.mxu0 %v756
        %884 = vmatpush1.bf16.msra.mxu0 %v755
        %885 = vmatprep.subr.bf16.mxu0 %v758
        %886 = vmatpush1.bf16.msra.mxu0 %v757
        %887 = vmatprep.subr.bf16.mxu0 %v760
        %888 = vmatpush1.bf16.msra.mxu0 %v759
        %889 = vmatprep.mubr.bf16.mxu0 %v522
        %890 = vmatmul.mubr.bf16.gmra.mrb[0].mxu0 %v521
        %v891 = vpop.f32.mrb[0].mxu0
        %v892 = vadd.f32 %v490, %v891
        %v893 = vpop.f32.mrb[0].mxu0
        %v894 = vadd.f32 %v494, %v893
        %v895 = vpop.f32.mrb[0].mxu0
        %v896 = vadd.f32 %v490, %v895
        %v897 = vpop.f32.mrb[0].mxu0
        %v898 = vadd.f32 %v494, %v897
        %899 = vmatprep.mubr.bf16.mxu0 %v526
        %900 = vmatmul.mubr.bf16.gmra.mrb[0].mxu0 %v525
        %v901 = vpop.f32.mrb[0].mxu0
        %v902 = vadd.f32 %v490, %v901
        %v903 = vpop.f32.mrb[0].mxu0
        %v904 = vadd.f32 %v494, %v903
        %v905 = vpop.f32.mrb[0].mxu0
        %v906 = vadd.f32 %v490, %v905
        %v907 = vpop.f32.mrb[0].mxu0
        %v908 = vadd.f32 %v494, %v907
        %909 = vdwg.mxu0
        %910 = vmatprep.subr.bf16.mxu0 %v762
        %911 = vmatpush1.bf16.msra.mxu0 %v761
        %912 = vmatprep.subr.bf16.mxu0 %v764
        %913 = vmatpush1.bf16.msra.mxu0 %v763
        %914 = vmatprep.subr.bf16.mxu0 %v766
        %915 = vmatpush1.bf16.msra.mxu0 %v765
        %916 = vmatprep.subr.bf16.mxu0 %v768
        %917 = vmatpush1.bf16.msra.mxu0 %v767
        %918 = vmatprep.subr.bf16.mxu0 %v770
        %919 = vmatpush1.bf16.msra.mxu0 %v769
        %920 = vmatprep.subr.bf16.mxu0 %v772
        %921 = vmatpush1.bf16.msra.mxu0 %v771
        %922 = vmatprep.subr.bf16.mxu0 %v774
        %923 = vmatpush1.bf16.msra.mxu0 %v773
        %924 = vmatprep.subr.bf16.mxu0 %v776
        %925 = vmatpush1.bf16.msra.mxu0 %v775
        %926 = vmatprep.subr.bf16.mxu0 %v778
        %927 = vmatpush1.bf16.msra.mxu0 %v777
        %928 = vmatprep.subr.bf16.mxu0 %v780
        %929 = vmatpush1.bf16.msra.mxu0 %v779
        %930 = vmatprep.subr.bf16.mxu0 %v782
        %931 = vmatpush1.bf16.msra.mxu0 %v781
        %932 = vmatprep.subr.bf16.mxu0 %v784
        %933 = vmatpush1.bf16.msra.mxu0 %v783
        %934 = vmatprep.subr.bf16.mxu0 %v786
        %935 = vmatpush1.bf16.msra.mxu0 %v785
        %936 = vmatprep.subr.bf16.mxu0 %v788
        %937 = vmatpush1.bf16.msra.mxu0 %v787
        %938 = vmatprep.subr.bf16.mxu0 %v790
        %939 = vmatpush1.bf16.msra.mxu0 %v789
        %940 = vmatprep.subr.bf16.mxu0 %v792
        %941 = vmatpush1.bf16.msra.mxu0 %v791
        %942 = vmatprep.mubr.bf16.mxu0 %v524
        %943 = vmatmul.mubr.bf16.gmra.mrb[0].mxu0 %v523
        %v944 = vpop.f32.mrb[0].mxu0
        %v945 = vadd.f32 %v892, %v944
        %v946 = vpop.f32.mrb[0].mxu0
        %v947 = vadd.f32 %v894, %v946
        %v948 = vpop.f32.mrb[0].mxu0
        %v949 = vadd.f32 %v896, %v948
        %v950 = vpop.f32.mrb[0].mxu0
        %v951 = vadd.f32 %v898, %v950
        %952 = vmatprep.mubr.bf16.mxu0 %v528
        %953 = vmatmul.mubr.bf16.gmra.mrb[0].mxu0 %v527
        %v954 = vpop.f32.mrb[0].mxu0
        %v955 = vadd.f32 %v902, %v954
        %v956 = vpop.f32.mrb[0].mxu0
        %v957 = vadd.f32 %v904, %v956
        %v958 = vpop.f32.mrb[0].mxu0
        %v959 = vadd.f32 %v906, %v958
        %v960 = vpop.f32.mrb[0].mxu0
        %v961 = vadd.f32 %v908, %v960
        %962 = vdwg.mxu0
        %v963 = vmax.f32 %v945, 0.0
        %v964 = vmax.f32 %v947, 0.0
        %v965 = vmax.f32 %v949, 0.0
        %v966 = vmax.f32 %v951, 0.0
        %v967 = vmax.f32 %v955, 0.0
        %v968 = vmax.f32 %v957, 0.0
        %v969 = vmax.f32 %v959, 0.0
        %v970 = vmax.f32 %v961, 0.0
        %v971 = vpack.c.bf16 %v965, %v963
        %v972 = vpack.c.bf16 %v966, %v964
        %v973 = vpack.c.bf16 %v969, %v967
        %v974 = vpack.c.bf16 %v970, %v968
        %v975 = vld [vmem:[#allocation7] sm:$0xf]
        %v976 = vld [vmem:[#allocation7 + $0x4] sm:$0xf]
        %v977 = vld [vmem:[#allocation7 + $0x8] sm:$0xf]
        %v978 = vld [vmem:[#allocation7 + $0xc] sm:$0xf]
        %v979 = vld [vmem:[#allocation7 + $0x10] sm:$0xf]
        %v980 = vld [vmem:[#allocation7 + $0x14] sm:$0xf]
        %v981 = vld [vmem:[#allocation7 + $0x18] sm:$0xf]
        %v982 = vld [vmem:[#allocation7 + $0x1c] sm:$0xf]
        %v983 = vld [vmem:[#allocation7 + $0x20] sm:$0xf]
        %v984 = vld [vmem:[#allocation7 + $0x24] sm:$0xf]
        %v985 = vld [vmem:[#allocation7 + $0x28] sm:$0xf]
        %v986 = vld [vmem:[#allocation7 + $0x2c] sm:$0xf]
        %v987 = vld [vmem:[#allocation7 + $0x30] sm:$0xf]
        %v988 = vld [vmem:[#allocation7 + $0x34] sm:$0xf]
        %v989 = vld [vmem:[#allocation7 + $0x38] sm:$0xf]
        %v990 = vld [vmem:[#allocation7 + $0x3c] sm:$0xf]
        %v991 = vld [vmem:[#allocation7 + $0x40] sm:$0xf]
        %v992 = vld [vmem:[#allocation7 + $0x44] sm:$0xf]
        %v993 = vld [vmem:[#allocation7 + $0x48] sm:$0xf]
        %v994 = vld [vmem:[#allocation7 + $0x4c] sm:$0xf]
        %v995 = vld [vmem:[#allocation7 + $0x50] sm:$0xf]
        %v996 = vld [vmem:[#allocation7 + $0x54] sm:$0xf]
        %v997 = vld [vmem:[#allocation7 + $0x58] sm:$0xf]
        %v998 = vld [vmem:[#allocation7 + $0x5c] sm:$0xf]
        %v999 = vld [vmem:[#allocation7 + $0x60] sm:$0xf]
        %v1000 = vld [vmem:[#allocation7 + $0x64] sm:$0xf]
        %v1001 = vld [vmem:[#allocation7 + $0x68] sm:$0xf]
        %v1002 = vld [vmem:[#allocation7 + $0x6c] sm:$0xf]
        %v1003 = vld [vmem:[#allocation7 + $0x70] sm:$0xf]
        %v1004 = vld [vmem:[#allocation7 + $0x74] sm:$0xf]
        %v1005 = vld [vmem:[#allocation7 + $0x78] sm:$0xf]
        %v1006 = vld [vmem:[#allocation7 + $0x7c] sm:$0xf]
        %v1007 = vld [vmem:[%s4] sm:$0x1]
        %v1009 = vlaneseq
        %v1010 = vshrl.u32 %v1009, 7
        %v1011 = vsub.s32 0, %v1010
        %v1012 = vrot.slane %v1007, %v1011
        %v1046 = vunpack.c.l.b16 %v975
        %v1047 = vunpack.c.l.b16 %v976
        %v1048 = vunpack.c.l.b16 %v977
        %v1049 = vunpack.c.l.b16 %v978
        %v1050 = vunpack.c.l.b16 %v979
        %v1051 = vunpack.c.l.b16 %v980
        %v1052 = vunpack.c.l.b16 %v981
        %v1053 = vunpack.c.l.b16 %v982
        %v1054 = vunpack.c.l.b16 %v983
        %v1055 = vunpack.c.l.b16 %v984
        %v1056 = vunpack.c.l.b16 %v985
        %v1057 = vunpack.c.l.b16 %v986
        %v1058 = vunpack.c.l.b16 %v987
        %v1059 = vunpack.c.l.b16 %v988
        %v1060 = vunpack.c.l.b16 %v989
        %v1061 = vunpack.c.l.b16 %v990
        %v1062 = vunpack.c.l.b16 %v991
        %v1063 = vunpack.c.l.b16 %v992
        %v1064 = vunpack.c.l.b16 %v993
        %v1065 = vunpack.c.l.b16 %v994
        %v1066 = vunpack.c.l.b16 %v995
        %v1067 = vunpack.c.l.b16 %v996
        %v1068 = vunpack.c.l.b16 %v997
        %v1069 = vunpack.c.l.b16 %v998
        %v1070 = vunpack.c.l.b16 %v999
        %v1071 = vunpack.c.l.b16 %v1000
        %v1072 = vunpack.c.l.b16 %v1001
        %v1073 = vunpack.c.l.b16 %v1002
        %v1074 = vunpack.c.l.b16 %v1003
        %v1075 = vunpack.c.l.b16 %v1004
        %v1076 = vunpack.c.l.b16 %v1005
        %v1077 = vunpack.c.l.b16 %v1006
        %v1078 = vpack.c.b16 %v1047, %v1046
        %v1079 = vpack.c.b16 %v1049, %v1048
        %v1080 = vpack.c.b16 %v1051, %v1050
        %v1081 = vpack.c.b16 %v1053, %v1052
        %v1082 = vpack.c.b16 %v1055, %v1054
        %v1083 = vpack.c.b16 %v1057, %v1056
        %v1084 = vpack.c.b16 %v1059, %v1058
        %v1085 = vpack.c.b16 %v1061, %v1060
        %v1086 = vpack.c.b16 %v1063, %v1062
        %v1087 = vpack.c.b16 %v1065, %v1064
        %v1088 = vpack.c.b16 %v1067, %v1066
        %v1089 = vpack.c.b16 %v1069, %v1068
        %v1090 = vpack.c.b16 %v1071, %v1070
        %v1091 = vpack.c.b16 %v1073, %v1072
        %v1092 = vpack.c.b16 %v1075, %v1074
        %v1093 = vpack.c.b16 %v1077, %v1076
        %1110 = vmatprep.subr.bf16.mxu0 0
        %1111 = vmatpush1.bf16.msra.mxu0 %v1078
        %1112 = vmatprep.subr.bf16.mxu0 0
        %1113 = vmatpush1.bf16.msra.mxu0 %v1079
        %1114 = vmatprep.subr.bf16.mxu0 0
        %1115 = vmatpush1.bf16.msra.mxu0 %v1080
        %1116 = vmatprep.subr.bf16.mxu0 0
        %1117 = vmatpush1.bf16.msra.mxu0 %v1081
        %1118 = vmatprep.subr.bf16.mxu0 0
        %1119 = vmatpush1.bf16.msra.mxu0 %v1082
        %1120 = vmatprep.subr.bf16.mxu0 0
        %1121 = vmatpush1.bf16.msra.mxu0 %v1083
        %1122 = vmatprep.subr.bf16.mxu0 0
        %1123 = vmatpush1.bf16.msra.mxu0 %v1084
        %1124 = vmatprep.subr.bf16.mxu0 0
        %1125 = vmatpush1.bf16.msra.mxu0 %v1085
        %1126 = vmatprep.subr.bf16.mxu0 0
        %1127 = vmatpush1.bf16.msra.mxu0 %v1086
        %1128 = vmatprep.subr.bf16.mxu0 0
        %1129 = vmatpush1.bf16.msra.mxu0 %v1087
        %1130 = vmatprep.subr.bf16.mxu0 0
        %1131 = vmatpush1.bf16.msra.mxu0 %v1088
        %1132 = vmatprep.subr.bf16.mxu0 0
        %1133 = vmatpush1.bf16.msra.mxu0 %v1089
        %1134 = vmatprep.subr.bf16.mxu0 0
        %1135 = vmatpush1.bf16.msra.mxu0 %v1090
        %1136 = vmatprep.subr.bf16.mxu0 0
        %1137 = vmatpush1.bf16.msra.mxu0 %v1091
        %1138 = vmatprep.subr.bf16.mxu0 0
        %1139 = vmatpush1.bf16.msra.mxu0 %v1092
        %1140 = vmatprep.subr.bf16.mxu0 0
        %1141 = vmatpush1.bf16.msra.mxu0 %v1093
        %1142 = vmatprep.mubr.bf16.mxu0 %v972
        %1143 = vmatmul.mubr.bf16.gmra.mrb[0].mxu0 %v971
        %v1144 = vpop.f32.mrb[0].mxu0
        %v1145 = vadd.f32 %v1012, %v1144
        %v1146 = vpop.f32.mrb[0].mxu0
        %v1147 = vpop.f32.mrb[0].mxu0
        %v1148 = vadd.f32 %v1012, %v1147
        %v1149 = vpop.f32.mrb[0].mxu0
        %1150 = vmatprep.mubr.bf16.mxu0 %v974
        %1151 = vmatmul.mubr.bf16.gmra.mrb[0].mxu0 %v973
        %v1152 = vpop.f32.mrb[0].mxu0
        %v1153 = vadd.f32 %v1012, %v1152
        %v1154 = vpop.f32.mrb[0].mxu0
        %v1155 = vpop.f32.mrb[0].mxu0
        %v1156 = vadd.f32 %v1012, %v1155
        %v1157 = vpop.f32.mrb[0].mxu0
        %1158 = vdwg.mxu0
        %v1159 = vmax.f32 %v1145, 0.0
        %v1160 = vmax.f32 %v1148, 0.0
        %v1161 = vmax.f32 %v1153, 0.0
        %v1162 = vmax.f32 %v1156, 0.0
        %v1163 = vpack.c.bf16 %v1160, %v1159
        %v1164 = vpack.c.bf16 %v1162, %v1161
        %v1165 = vld [vmem:[#allocation8] sm:$0xf]
        %v1166 = vld [vmem:[#allocation8 + $0x4] sm:$0xf]
        %v1167 = vld [vmem:[#allocation8 + $0x8] sm:$0xf]
        %v1168 = vld [vmem:[#allocation8 + $0xc] sm:$0xf]
        %v1169 = vld [vmem:[#allocation8 + $0x10] sm:$0xf]
        %v1170 = vld [vmem:[#allocation8 + $0x14] sm:$0xf]
        %v1171 = vld [vmem:[#allocation8 + $0x18] sm:$0xf]
        %v1172 = vld [vmem:[#allocation8 + $0x1c] sm:$0xf]
        %v1173 = vld [vmem:[#allocation8 + $0x20] sm:$0xf]
        %v1174 = vld [vmem:[#allocation8 + $0x24] sm:$0xf]
        %v1175 = vld [vmem:[#allocation8 + $0x28] sm:$0xf]
        %v1176 = vld [vmem:[#allocation8 + $0x2c] sm:$0xf]
        %v1177 = vld [vmem:[#allocation8 + $0x30] sm:$0xf]
        %v1178 = vld [vmem:[#allocation8 + $0x34] sm:$0xf]
        %v1179 = vld [vmem:[#allocation8 + $0x38] sm:$0xf]
        %v1180 = vld [vmem:[#allocation8 + $0x3c] sm:$0xf]
        %v1181 = vld [vmem:[%s6] sm:$0x1]
        %v1183 = vlaneseq
        %v1184 = vshrl.u32 %v1183, 7
        %v1185 = vsub.s32 0, %v1184
        %v1186 = vrot.slane %v1181, %v1185
        %v1204 = vunpack.c.l.b16 %v1165
        %v1205 = vunpack.c.l.b16 %v1166
        %v1206 = vunpack.c.l.b16 %v1167
        %v1207 = vunpack.c.l.b16 %v1168
        %v1208 = vunpack.c.l.b16 %v1169
        %v1209 = vunpack.c.l.b16 %v1170
        %v1210 = vunpack.c.l.b16 %v1171
        %v1211 = vunpack.c.l.b16 %v1172
        %v1212 = vunpack.c.l.b16 %v1173
        %v1213 = vunpack.c.l.b16 %v1174
        %v1214 = vunpack.c.l.b16 %v1175
        %v1215 = vunpack.c.l.b16 %v1176
        %v1216 = vunpack.c.l.b16 %v1177
        %v1217 = vunpack.c.l.b16 %v1178
        %v1218 = vunpack.c.l.b16 %v1179
        %v1219 = vunpack.c.l.b16 %v1180
        %v1220 = vpack.c.b16 %v1205, %v1204
        %v1221 = vpack.c.b16 %v1207, %v1206
        %v1222 = vpack.c.b16 %v1209, %v1208
        %v1223 = vpack.c.b16 %v1211, %v1210
        %v1224 = vpack.c.b16 %v1213, %v1212
        %v1225 = vpack.c.b16 %v1215, %v1214
        %v1226 = vpack.c.b16 %v1217, %v1216
        %v1227 = vpack.c.b16 %v1219, %v1218
        %1236 = vmatprep.subr.bf16.mxu0 0
        %1237 = vmatpush1.bf16.msra.mxu0 %v1220
        %1238 = vmatprep.subr.bf16.mxu0 0
        %1239 = vmatpush1.bf16.msra.mxu0 %v1221
        %1240 = vmatprep.subr.bf16.mxu0 0
        %1241 = vmatpush1.bf16.msra.mxu0 %v1222
        %1242 = vmatprep.subr.bf16.mxu0 0
        %1243 = vmatpush1.bf16.msra.mxu0 %v1223
        %1244 = vmatprep.subr.bf16.mxu0 0
        %1245 = vmatpush1.bf16.msra.mxu0 %v1224
        %1246 = vmatprep.subr.bf16.mxu0 0
        %1247 = vmatpush1.bf16.msra.mxu0 %v1225
        %1248 = vmatprep.subr.bf16.mxu0 0
        %1249 = vmatpush1.bf16.msra.mxu0 %v1226
        %1250 = vmatprep.subr.bf16.mxu0 0
        %1251 = vmatpush1.bf16.msra.mxu0 %v1227
        %1252 = vmatprep.subr.bf16.mxu0 0
        %1253 = vmatpush1.bf16.msra.mxu0 0
        %1254 = vmatprep.subr.bf16.mxu0 0
        %1255 = vmatpush1.bf16.msra.mxu0 0
        %1256 = vmatprep.subr.bf16.mxu0 0
        %1257 = vmatpush1.bf16.msra.mxu0 0
        %1258 = vmatprep.subr.bf16.mxu0 0
        %1259 = vmatpush1.bf16.msra.mxu0 0
        %1260 = vmatprep.subr.bf16.mxu0 0
        %1261 = vmatpush1.bf16.msra.mxu0 0
        %1262 = vmatprep.subr.bf16.mxu0 0
        %1263 = vmatpush1.bf16.msra.mxu0 0
        %1264 = vmatprep.subr.bf16.mxu0 0
        %1265 = vmatpush1.bf16.msra.mxu0 0
        %1266 = vmatprep.subr.bf16.mxu0 0
        %1267 = vmatpush1.bf16.msra.mxu0 0
        %1268 = vmatprep.mubr.bf16.mxu0 0
        %1269 = vmatmul.mubr.bf16.gmra.mrb[0].mxu0 %v1163
        %v1270 = vpop.f32.mrb[0].mxu0
        %v1271 = vadd.f32 %v1186, %v1270
        %v1272 = vpop.f32.mrb[0].mxu0
        %v1273 = vpop.f32.mrb[0].mxu0
        %v1274 = vadd.f32 %v1186, %v1273
        %v1275 = vpop.f32.mrb[0].mxu0
        %1276 = vmatprep.mubr.bf16.mxu0 0
        %1277 = vmatmul.mubr.bf16.gmra.mrb[0].mxu0 %v1164
        %v1278 = vpop.f32.mrb[0].mxu0
        %v1279 = vadd.f32 %v1186, %v1278
        %v1280 = vpop.f32.mrb[0].mxu0
        %v1281 = vpop.f32.mrb[0].mxu0
        %v1282 = vadd.f32 %v1186, %v1281
        %v1283 = vpop.f32.mrb[0].mxu0
        %1284 = vdwg.mxu0
        %v1285 = vmax.f32 %v1271, 0.0
        %v1286 = vmax.f32 %v1274, 0.0
        %v1287 = vmax.f32 %v1279, 0.0
        %v1288 = vmax.f32 %v1282, 0.0
        %v1289 = vpack.c.bf16 %v1286, %v1285
        %v1290 = vpack.c.bf16 %v1288, %v1287
        %v1291 = vld [vmem:[#allocation10] sm:$0xf]
        %v1292 = vld [vmem:[#allocation10 + $0x4] sm:$0xf]
        %v1293 = vld [vmem:[#allocation10 + $0x8] sm:$0xf]
        %v1294 = vld [vmem:[#allocation10 + $0xc] sm:$0xf]
        %v1295 = vld [vmem:[#allocation10 + $0x10] sm:$0xf]
        %v1296 = vld [vmem:[#allocation10 + $0x14] sm:$0xf]
        %v1297 = vld [vmem:[#allocation10 + $0x18] sm:$0xf]
        %v1298 = vld [vmem:[#allocation10 + $0x1c] sm:$0xf]
        %v1299 = vld [vmem:[#allocation10 + $0x20] sm:$0xf]
        %v1300 = vld [vmem:[#allocation10 + $0x24] sm:$0xf]
        %v1301 = vld [vmem:[#allocation10 + $0x28] sm:$0xf]
        %v1302 = vld [vmem:[#allocation10 + $0x2c] sm:$0xf]
        %v1303 = vld [vmem:[#allocation10 + $0x30] sm:$0xf]
        %v1304 = vld [vmem:[#allocation10 + $0x34] sm:$0xf]
        %v1305 = vld [vmem:[#allocation10 + $0x38] sm:$0xf]
        %v1306 = vld [vmem:[#allocation10 + $0x3c] sm:$0xf]
        %v1307 = vld [vmem:[%s8] sm:$0x1]
        %v1309 = vlaneseq
        %v1310 = vshrl.u32 %v1309, 7
        %v1311 = vsub.s32 0, %v1310
        %v1312 = vrot.slane %v1307, %v1311
        %v1330 = vunpack.c.l.b16 %v1291
        %v1331 = vunpack.c.l.b16 %v1292
        %v1332 = vunpack.c.l.b16 %v1293
        %v1333 = vunpack.c.l.b16 %v1294
        %v1334 = vunpack.c.l.b16 %v1295
        %v1335 = vunpack.c.l.b16 %v1296
        %v1336 = vunpack.c.l.b16 %v1297
        %v1337 = vunpack.c.l.b16 %v1298
        %v1338 = vunpack.c.l.b16 %v1299
        %v1339 = vunpack.c.l.b16 %v1300
        %v1340 = vunpack.c.l.b16 %v1301
        %v1341 = vunpack.c.l.b16 %v1302
        %v1342 = vunpack.c.l.b16 %v1303
        %v1343 = vunpack.c.l.b16 %v1304
        %v1344 = vunpack.c.l.b16 %v1305
        %v1345 = vunpack.c.l.b16 %v1306
        %v1346 = vpack.c.b16 %v1331, %v1330
        %v1347 = vpack.c.b16 %v1333, %v1332
        %v1348 = vpack.c.b16 %v1335, %v1334
        %v1349 = vpack.c.b16 %v1337, %v1336
        %v1350 = vpack.c.b16 %v1339, %v1338
        %v1351 = vpack.c.b16 %v1341, %v1340
        %v1352 = vpack.c.b16 %v1343, %v1342
        %v1353 = vpack.c.b16 %v1345, %v1344
        %1362 = vmatprep.subr.bf16.mxu0 0
        %1363 = vmatpush1.bf16.msra.mxu0 %v1346
        %1364 = vmatprep.subr.bf16.mxu0 0
        %1365 = vmatpush1.bf16.msra.mxu0 %v1347
        %1366 = vmatprep.subr.bf16.mxu0 0
        %1367 = vmatpush1.bf16.msra.mxu0 %v1348
        %1368 = vmatprep.subr.bf16.mxu0 0
        %1369 = vmatpush1.bf16.msra.mxu0 %v1349
        %1370 = vmatprep.subr.bf16.mxu0 0
        %1371 = vmatpush1.bf16.msra.mxu0 %v1350
        %1372 = vmatprep.subr.bf16.mxu0 0
        %1373 = vmatpush1.bf16.msra.mxu0 %v1351
        %1374 = vmatprep.subr.bf16.mxu0 0
        %1375 = vmatpush1.bf16.msra.mxu0 %v1352
        %1376 = vmatprep.subr.bf16.mxu0 0
        %1377 = vmatpush1.bf16.msra.mxu0 %v1353
        %1378 = vmatprep.subr.bf16.mxu0 0
        %1379 = vmatpush1.bf16.msra.mxu0 0
        %1380 = vmatprep.subr.bf16.mxu0 0
        %1381 = vmatpush1.bf16.msra.mxu0 0
        %1382 = vmatprep.subr.bf16.mxu0 0
        %1383 = vmatpush1.bf16.msra.mxu0 0
        %1384 = vmatprep.subr.bf16.mxu0 0
        %1385 = vmatpush1.bf16.msra.mxu0 0
        %1386 = vmatprep.subr.bf16.mxu0 0
        %1387 = vmatpush1.bf16.msra.mxu0 0
        %1388 = vmatprep.subr.bf16.mxu0 0
        %1389 = vmatpush1.bf16.msra.mxu0 0
        %1390 = vmatprep.subr.bf16.mxu0 0
        %1391 = vmatpush1.bf16.msra.mxu0 0
        %1392 = vmatprep.subr.bf16.mxu0 0
        %1393 = vmatpush1.bf16.msra.mxu0 0
        %1394 = vmatprep.mubr.bf16.mxu0 0
        %1395 = vmatmul.mubr.bf16.gmra.mrb[0].mxu0 %v1289
        %v1396 = vpop.f32.mrb[0].mxu0
        %v1397 = vadd.f32 %v1312, %v1396
        %v1398 = vpop.f32.mrb[0].mxu0
        %v1399 = vpop.f32.mrb[0].mxu0
        %v1400 = vadd.f32 %v1312, %v1399
        %v1401 = vpop.f32.mrb[0].mxu0
        %1402 = vmatprep.mubr.bf16.mxu0 0
        %1403 = vmatmul.mubr.bf16.gmra.mrb[0].mxu0 %v1290
        %v1404 = vpop.f32.mrb[0].mxu0
        %v1405 = vadd.f32 %v1312, %v1404
        %v1406 = vpop.f32.mrb[0].mxu0
        %v1407 = vpop.f32.mrb[0].mxu0
        %v1408 = vadd.f32 %v1312, %v1407
        %v1409 = vpop.f32.mrb[0].mxu0
        %1410 = vdwg.mxu0
        %1411 = vst [vmem:[%s409] sm:$0xff] %v1397
        %1412 = vst [vmem:[%s409 + $0x8] sm:$0xff] %v1400
        %1413 = vst [vmem:[%s409 + $0x10] sm:$0xff] %v1405
        %1414 = vst [vmem:[%s409 + $0x18] sm:$0xff] %v1408
        %s1415 = sand.u32 %s230, 1
        %s1416 = scalar_lea.sflag [#allocation4], %s1415
        %s1417 = sand.u32 %s230, 1
        %s1418 = smul.addr %s1417, 32
        %s1419 = scalar_lea.vmem [#allocation11], %s1418
        // Predicated region
        $region77: #{tpu_custom_call.1} parent=55 // pred_check
          %p1420 = pneg %p240
        $region78: #{tpu_custom_call.1} parent=55 // pred_check_branch
          %1422 = sbr.rel (%p1420) target = $region80
        $region79: #{tpu_custom_call.1} parent=55 // pred_region
          %s1423 = smul.u32 4, %s28
          %s1425 = ssub.s32 512, 512
          %1426 = vsyncadd %s1416, %s1425
          %s1427 = smul.addr %s1423, 128
          %s1428 = scalar_lea.hbm %s9, %s1427
          %s1429 = sshll.u32 %s1419, 4
          %s1430 = int_to_ptr.vmem [resolvable:$true] %s1429
          %1435 = dma.vmem_to_hbm [thread:$0]  %s1430, 512, %s1428, %s1416, 128, 128, 8
        $region80: #{tpu_custom_call.1} parent=55 // pred_fallthru
          _
      $region56: #{tpu_custom_call.1} parent=5 // pred_fallthru
        _
      %p1436 = scmp.le.s32.totalorder 2, %s23
      // Predicated region
      $region81: #{tpu_custom_call.1} parent=5 // pred_check
        %p1437 = pneg %p1436
      $region82: #{tpu_custom_call.1} parent=5 // pred_check_branch
        %1439 = sbr.rel (%p1437) target = $region84
      $region83: #{tpu_custom_call.1} parent=5 // pred_region
        %s1440 = ssub.s32 %s23, 2
        // Predicated region
        $region85: #{tpu_custom_call.1} parent=83 // pred_check
          %p1441 = pneg %p246
        $region86: #{tpu_custom_call.1} parent=83 // pred_check_branch
          %1443 = sbr.rel (%p1441) target = $region88
        $region87: #{tpu_custom_call.1} parent=83 // pred_region
          %s1444 = sand.u32 %s231, 1
          %s1445 = scalar_lea.sflag [#allocation4], %s1444
          %s1446 = sand.u32 %s231, 1
          %s1447 = smul.addr %s1446, 32
          %s1448 = scalar_lea.vmem [#allocation11], %s1447
          %1449 = dma.done %s1445, 512
        $region88: #{tpu_custom_call.1} parent=83 // pred_fallthru
          _
      $region84: #{tpu_custom_call.1} parent=5 // pred_fallthru
        _
    $region6: #{tpu_custom_call.1} parent=1 // loop_footer
      %s27 = sadd.s32 1, %s23
    $region7: #{tpu_custom_call.1} parent=1 // loop_footer_branch
      %22 = sbr.rel target = $region3
    $region8: #{tpu_custom_call.1} parent=1 // loop_exit
      _
    %1450 = vsyncpa [#allocation3], 1
    %s1451 = scalar_lea.sflag [#allocation3], 1
    %1452 = vsyncpa %s1451, 1
    %1453 = vsyncpa [#allocation6], 1
    %1454 = vsyncpa [#allocation9], 1
    %1455 = vsyncpa [#allocation4], 1
    %s1456 = scalar_lea.sflag [#allocation4], 1
    %1457 = vsyncpa %s1456, 1

</llo_original>
